<compile_context>
chip_gen: v5e
topology: v5e:2x2
jax: 0.10.0
libtpu: 0.0.40
codegen_flags: <defaults>
</compile_context>

<pallas_src>
import functools
import numpy as np
import jax
import jax.numpy as jnp
from jax import lax
from jax.experimental import pallas as pl
from jax.experimental.pallas import tpu as pltpu


# --------------------------- kernel 1: K/V projection --------------------------- #

def kv_proj_kernel(x_ref, wk_ref, bk_ref, wv_ref, bv_ref, k_ref, v_ref, *, n_heads):
    """Head-major K/V projection for one (batch, key-tile): (TS, D) -> (H, TS, d)."""
    x = x_ref[0]                                               # (TS, D) bf16
    ts, d_model = x.shape
    xb = jnp.broadcast_to(x[None], (n_heads, ts, d_model))     # hoisted once, reused for K and V

    k = jnp.einsum('hsd,hde->hse', xb, wk_ref[...],
                   preferred_element_type=jnp.float32) + bk_ref[...]
    v = jnp.einsum('hsd,hde->hse', xb, wv_ref[...],
                   preferred_element_type=jnp.float32) + bv_ref[...]
    k_ref[0] = k.astype(jnp.bfloat16)
    v_ref[0] = v.astype(jnp.bfloat16)


def kv_proj_pallas(x, p, *, n_heads, d_k, d_v):
    B, S, D = x.shape
    TS = S if S <= 256 else 256
    assert S % TS == 0
    const = lambda shape: pl.BlockSpec(shape, lambda b, s: (0,) * len(shape))
    return pl.pallas_call(
        functools.partial(kv_proj_kernel, n_heads=n_heads),
        out_shape=(jax.ShapeDtypeStruct((B, n_heads, S, d_k), jnp.bfloat16),
                   jax.ShapeDtypeStruct((B, n_heads, S, d_v), jnp.bfloat16)),
        grid=(B, S // TS),
        in_specs=[
            pl.BlockSpec((1, TS, D), lambda b, s: (b, s, 0)),     # x tile (bf16)
            const((n_heads, D, d_k)), const((n_heads, 1, d_k)),   # Wk, bk (head-major)
            const((n_heads, D, d_v)), const((n_heads, 1, d_v)),   # Wv, bv (head-major)
        ],
        out_specs=(pl.BlockSpec((1, n_heads, TS, d_k), lambda b, s: (b, 0, s, 0)),
                   pl.BlockSpec((1, n_heads, TS, d_v), lambda b, s: (b, 0, s, 0))),
        compiler_params=pltpu.CompilerParams(
            dimension_semantics=("parallel", "parallel"),
            vmem_limit_bytes=64 * 1024 * 1024),
    )(x, p["wk"], p["bk"], p["wv"], p["bv"])


# ---------------------- kernel 2: attention + FFN per query tile ---------------------- #

def attn_ffn_kernel(pad_ref, x_ref, k_ref, v_ref,
                    wq_ref, bq_ref, wo_ref,
                    w1_ref, b1_ref, w2_ref, vec_ref,
                    out_ref, attn_ref,
                    m_sc, l_sc, acc_sc,
                    *, n_heads, d_k, tq, tk):
    H = n_heads
    S = k_ref.shape[2]
    D = x_ref.shape[2]
    n_kv = S // tk
    eps = jnp.float32(1e-5)
    scale = jnp.float32(1.0 / np.sqrt(d_k))

    # packed per-layer vectors: rows = [bo, ln1_gamma, ln1_beta, b2, ln2_gamma, ln2_beta]
    vec = vec_ref[...]                                         # (6, D) f32
    bo, g1, be1, b2, g2, be2 = (vec[0:1], vec[1:2], vec[2:3],
                                vec[3:4], vec[4:5], vec[5:6])

    xq_bf = x_ref[0]                                           # (TQ, D) bf16 (query tile only)
    xq = xq_bf.astype(jnp.float32)                             # residual path in f32

    # ---- head-major Q projection (H, TQ, d_k); 1/sqrt(d_k) folded into q ----
    xb = jnp.broadcast_to(xq_bf[None], (H, tq, D))             # hoisted, single broadcast
    q = jnp.einsum('hqd,hde->hqe', xb, wq_ref[...],
                   preferred_element_type=jnp.float32)
    qh = ((q + bq_ref[...]) * scale).astype(jnp.bfloat16)      # (H, TQ, d_k) bf16

    # ---- pass 1: exact softmax statistics streamed over TK-sized key chunks ----
    m_sc[...] = jnp.full(m_sc.shape, -jnp.inf, dtype=jnp.float32)
    l_sc[...] = jnp.zeros(l_sc.shape, jnp.float32)
    acc_sc[...] = jnp.zeros(acc_sc.shape, jnp.float32)

    @pl.loop(0, n_kv)
    def _(t):
        ks = pl.multiple_of(t * tk, tk)
        kc = k_ref[0, :, pl.ds(ks, tk), :]                     # (H, TK, d_k) bf16
        neg = pad_ref[0, :, pl.ds(ks, tk)] * jnp.float32(-1e9)  # (1, TK) additive key-pad mask
        s = jnp.einsum('hqe,hke->hqk', qh, kc,
                       preferred_element_type=jnp.float32) + neg[None]
        m_prev = m_sc[...]
        m_new = jnp.maximum(m_prev, jnp.max(s, axis=-1, keepdims=True))
        l_sc[...] = (l_sc[...] * jnp.exp(m_prev - m_new)
                     + jnp.sum(jnp.exp(s - m_new), axis=-1, keepdims=True))
        m_sc[...] = m_new

    m_fin = m_sc[...]
    inv_l = 1.0 / l_sc[...]                                    # exact denominator (PyTorch parity)

    # ---- pass 2: normalised probabilities (bf16 writeback) + context accumulation ----
    @pl.loop(0, n_kv)
    def _(t):
        ks = pl.multiple_of(t * tk, tk)
        kc = k_ref[0, :, pl.ds(ks, tk), :]
        vc = v_ref[0, :, pl.ds(ks, tk), :]
        neg = pad_ref[0, :, pl.ds(ks, tk)] * jnp.float32(-1e9)
        s = jnp.einsum('hqe,hke->hqk', qh, kc,
                       preferred_element_type=jnp.float32) + neg[None]
        p = jnp.exp(s - m_fin) * inv_l                         # (H, TQ, TK) f32, rows sum to 1
        attn_ref[0, :, :, pl.ds(ks, tk)] = p.astype(jnp.bfloat16)
        acc_sc[...] += jnp.einsum('hqk,hke->hqe', p.astype(jnp.bfloat16), vc,
                                  preferred_element_type=jnp.float32)

    # ---- output projection: head-partitioned Wo accumulated per head (no lane merge) ----
    ctx = acc_sc[...]                                          # (H, TQ, d_v) f32
    proj = jnp.dot(ctx[0].astype(jnp.bfloat16), wo_ref[0],
                   preferred_element_type=jnp.float32)
    for h in range(1, H):                                      # wide (d_v -> D) MXU matmuls
        proj = proj + jnp.dot(ctx[h].astype(jnp.bfloat16), wo_ref[h],
                              preferred_element_type=jnp.float32)
    mha = proj + bo                                            # (TQ, D) f32

    # ---- residual + LayerNorm 1 (centered variance, f32) ----
    y = mha + xq
    mu1 = jnp.mean(y, axis=-1, keepdims=True)
    yc = y - mu1
    var1 = jnp.mean(yc * yc, axis=-1, keepdims=True)
    y = yc * lax.rsqrt(var1 + eps) * g1 + be1

    # ---- position-wise FFN (conv1d kernel_size=1 == linear), bf16 MXU matmuls ----
    h1 = jnp.maximum(
        jnp.dot(y.astype(jnp.bfloat16), w1_ref[...],
                preferred_element_type=jnp.float32) + b1_ref[...], 0.0)
    h2 = jnp.dot(h1.astype(jnp.bfloat16), w2_ref[...],
                 preferred_element_type=jnp.float32) + b2

    # ---- residual + LayerNorm 2 (centered variance); bf16 inter-layer activation ----
    z = h2 + y
    mu2 = jnp.mean(z, axis=-1, keepdims=True)
    zc = z - mu2
    var2 = jnp.mean(zc * zc, axis=-1, keepdims=True)
    out_ref[0] = (zc * lax.rsqrt(var2 + eps) * g2 + be2).astype(jnp.bfloat16)


def encoder_layer_pallas(x, pad, p, *, n_heads, d_k, d_v):
    """One encoder layer = K/V-projection pallas_call + attention/FFN pallas_call."""
    B, S, D = x.shape
    F = p["w1"].shape[1]
    # 256-row tiles fill the 256-wide MXU on v6e/v7x (prefer 128 on v5e); toy S -> one tile.
    TQ = S if S <= 256 else 256
    TK = S if S <= 256 else 256
    assert S % TQ == 0 and S % TK == 0

    k, v = kv_proj_pallas(x, p, n_heads=n_heads, d_k=d_k, d_v=d_v)

    const = lambda shape: pl.BlockSpec(shape, lambda b, q: (0,) * len(shape))
    kernel = functools.partial(attn_ffn_kernel, n_heads=n_heads, d_k=d_k, tq=TQ, tk=TK)

    out, attn = pl.pallas_call(
        kernel,
        out_shape=(
            jax.ShapeDtypeStruct((B, S, D), jnp.bfloat16),          # bf16 inter-layer activation
            jax.ShapeDtypeStruct((B, n_heads, S, S), jnp.bfloat16),  # bf16 attention probs
        ),
        grid=(B, S // TQ),
        in_specs=[
            pl.BlockSpec((1, 1, S), lambda b, q: (b, 0, 0)),                # key-pad vector
            pl.BlockSpec((1, TQ, D), lambda b, q: (b, q, 0)),               # x: query tile only
            pl.BlockSpec((1, n_heads, S, d_k), lambda b, q: (b, 0, 0, 0)),  # K (head-major bf16)
            pl.BlockSpec((1, n_heads, S, d_v), lambda b, q: (b, 0, 0, 0)),  # V (head-major bf16)
            const((n_heads, D, d_k)), const((n_heads, 1, d_k)),             # Wq, bq (head-major)
            const((n_heads, d_v, D)),                                       # Wo (head-partitioned)
            const((D, F)), const((1, F)), const((F, D)),                    # W1, b1, W2
            const((6, D)),                                                  # packed bo/LN1/b2/LN2
        ],
        out_specs=(
            pl.BlockSpec((1, TQ, D), lambda b, q: (b, q, 0)),
            pl.BlockSpec((1, n_heads, TQ, S), lambda b, q: (b, 0, q, 0)),
        ),
        scratch_shapes=[
            pltpu.VMEM((n_heads, TQ, 1), jnp.float32),    # running max
            pltpu.VMEM((n_heads, TQ, 1), jnp.float32),    # running denominator
            pltpu.VMEM((n_heads, TQ, d_v), jnp.float32),  # context accumulator
        ],
        compiler_params=pltpu.CompilerParams(
            dimension_semantics=("parallel", "parallel"),
            vmem_limit_bytes=64 * 1024 * 1024),
    )(pad, x, k, v, p["wq"], p["bq"], p["wo"], p["w1"], p["b1"], p["w2"], p["vecD"])
    return out, attn


# ----------------------------- plain-JAX glue ------------------------------ #

def get_sincos_encoding(n_position, d_model):
    pos = np.arange(n_position)[:, None].astype(np.float64)
    i = np.arange(d_model)[None, :]
    angle = pos / np.power(10000.0, 2 * (i // 2) / d_model)
    table = np.zeros((n_position, d_model), dtype=np.float32)
    table[:, 0::2] = np.sin(angle[:, 0::2])
    table[:, 1::2] = np.cos(angle[:, 1::2])
    return jnp.asarray(table)


def init_params(key, vocab, src_len, d_model, d_ffn, d_k, d_v, n_heads, n_layers):
    keys = jax.random.split(key, 1 + 6 * n_layers)
    s = 0.02
    params = {
        "emb": s * jax.random.normal(keys[0], (vocab, d_model), jnp.float32),
        "pos": get_sincos_encoding(src_len + 1, d_model),
        "layers": [],
    }
    for l in range(n_layers):
        k = keys[1 + 6 * l: 1 + 6 * (l + 1)]
        layer = {
            # head-major projection weights, bf16 for the MXU; biases / LN params f32
            "wq": (s * jax.random.normal(k[0], (n_heads, d_model, d_k), jnp.float32)).astype(jnp.bfloat16),
            "bq": jnp.zeros((n_heads, 1, d_k), jnp.float32),
            "wk": (s * jax.random.normal(k[1], (n_heads, d_model, d_k), jnp.float32)).astype(jnp.bfloat16),
            "bk": jnp.zeros((n_heads, 1, d_k), jnp.float32),
            "wv": (s * jax.random.normal(k[2], (n_heads, d_model, d_v), jnp.float32)).astype(jnp.bfloat16),
            "bv": jnp.zeros((n_heads, 1, d_v), jnp.float32),
            "wo": (s * jax.random.normal(k[3], (n_heads, d_v, d_model), jnp.float32)).astype(jnp.bfloat16),
            "w1": (s * jax.random.normal(k[4], (d_model, d_ffn), jnp.float32)).astype(jnp.bfloat16),
            "b1": jnp.zeros((1, d_ffn), jnp.float32),
            "w2": (s * jax.random.normal(k[5], (d_ffn, d_model), jnp.float32)).astype(jnp.bfloat16),
            # packed (6, D) f32: rows = [bo, ln1_gamma, ln1_beta, b2, ln2_gamma, ln2_beta]
            "vecD": jnp.concatenate([
                jnp.zeros((1, d_model), jnp.float32), jnp.ones((1, d_model), jnp.float32),
                jnp.zeros((2, d_model), jnp.float32), jnp.ones((1, d_model), jnp.float32),
                jnp.zeros((1, d_model), jnp.float32)], axis=0),
        }
        params["layers"].append(layer)
    return params


def encoder_forward(tokens, params, *, n_heads, d_k, d_v):
    B, S = tokens.shape
    # TODO(synk): embedding gather (token -> row lookup) + frozen sinusoidal pos-enc stay in
    # plain JAX; a pl.Element-based gather kernel is not worth it at these sizes.
    x = params["emb"][tokens] + params["pos"][jnp.arange(S)][None, :, :]
    x = x.astype(jnp.bfloat16)                       # bf16 inter-layer activations
    # key-pad vector only (the (S,S) mask is folded in-kernel): 1.0 where token id == 0
    pad = (tokens == 0).astype(jnp.float32)[:, None, :]          # (B, 1, S)
    attns = []
    for layer in params["layers"]:
        x, attn = encoder_layer_pallas(x, pad, layer, n_heads=n_heads, d_k=d_k, d_v=d_v)
        attns.append(attn)
    return x.astype(jnp.float32), attns              # f32 output for API parity


# --------------------------------- main ------------------------------------ #

if __name__ == "__main__":
    vocab, src_len = 16, 8
    d_model, d_ffn, d_k, d_v, n_heads, n_layers = 32, 64, 8, 8, 4, 2
    B, S = 2, 8

    key = jax.random.PRNGKey(0)
    kp, kt = jax.random.split(key)
    params = init_params(kp, vocab, src_len, d_model, d_ffn, d_k, d_v, n_heads, n_layers)

    tokens = jax.random.randint(kt, (B, S), 1, vocab)
    tokens = tokens.at[:, -2:].set(0)   # trailing pad tokens exercise the attention mask

    out, attns = encoder_forward(tokens, params, n_heads=n_heads, d_k=d_k, d_v=d_v)
    jax.block_until_ready(out)
    for a in attns:
        jax.block_until_ready(a)

    assert out.shape == (B, S, d_model)
    assert all(a.shape == (B, n_heads, S, S) for a in attns)
    assert bool(jnp.all(jnp.isfinite(out)))
    # attention rows should sum to ~1 (bf16 prob storage => sum in f32, loose tolerance)
    row_sums = jnp.sum(attns[0].astype(jnp.float32), axis=-1)
    assert bool(jnp.all(jnp.abs(row_sums - 1.0) < 1e-2))
    print("KERNEL_OK")
</pallas_src>

<mosaic_0001>
module attributes {stable_mosaic.version = 11 : i64} {
  func.func @kv_proj_kernel(%arg0: i32, %arg1: i32, %arg2: memref<1x8x32xbf16, #tpu.memory_space<vmem>>, %arg3: memref<4x32x8xbf16, #tpu.memory_space<vmem>>, %arg4: memref<4x1x8xf32, #tpu.memory_space<vmem>>, %arg5: memref<4x32x8xbf16, #tpu.memory_space<vmem>>, %arg6: memref<4x1x8xf32, #tpu.memory_space<vmem>>, %arg7: memref<1x4x8x8xbf16, #tpu.memory_space<vmem>>, %arg8: memref<1x4x8x8xbf16, #tpu.memory_space<vmem>>) attributes {dimension_semantics = [#tpu.dimension_semantics<parallel>, #tpu.dimension_semantics<parallel>], iteration_bounds = array<i64: 2, 1>, scalar_prefetch = 0 : i64, scratch_operands = 0 : i64, tpu.core_type = #tpu.core_type<tc>, window_params = [{transform_indices = @transform_0, window_bounds = array<i64: 1, 8, 32>}, {pipeline_mode = #tpu.pipeline_mode<synchronous>, transform_indices = @transform_1, window_bounds = array<i64: 4, 32, 8>}, {pipeline_mode = #tpu.pipeline_mode<synchronous>, transform_indices = @transform_2, window_bounds = array<i64: 4, 1, 8>}, {pipeline_mode = #tpu.pipeline_mode<synchronous>, transform_indices = @transform_3, window_bounds = array<i64: 4, 32, 8>}, {pipeline_mode = #tpu.pipeline_mode<synchronous>, transform_indices = @transform_4, window_bounds = array<i64: 4, 1, 8>}, {transform_indices = @transform_5, window_bounds = array<i64: 1, 4, 8, 8>}, {transform_indices = @transform_6, window_bounds = array<i64: 1, 4, 8, 8>}]} {
    %c0 = arith.constant 0 : index
    %c0_0 = arith.constant 0 : index
    %c0_1 = arith.constant 0 : index
    %0 = vector.load %arg2[%c0, %c0_0, %c0_1] : memref<1x8x32xbf16, #tpu.memory_space<vmem>>, vector<1x8x32xbf16>
    %1 = vector.shape_cast %0 : vector<1x8x32xbf16> to vector<8x32xbf16>
    %2 = vector.shape_cast %1 : vector<8x32xbf16> to vector<1x8x32xbf16>
    %3 = vector.shape_cast %2 : vector<1x8x32xbf16> to vector<1x8x32xbf16>
    %4 = vector.broadcast %3 : vector<1x8x32xbf16> to vector<4x8x32xbf16>
    %c0_2 = arith.constant 0 : index
    %c0_3 = arith.constant 0 : index
    %c0_4 = arith.constant 0 : index
    %5 = vector.load %arg3[%c0_2, %c0_3, %c0_4] : memref<4x32x8xbf16, #tpu.memory_space<vmem>>, vector<4x32x8xbf16>
    "tpu.trace_start"() <{level = 10 : i32, message = "hsd,hde->hse"}> : () -> ()
    %cst = arith.constant dense<0.000000e+00> : vector<4x8x8xf32>
    %6 = tpu.matmul %4, %5, %cst {dimension_numbers = #tpu.dot_dimension_numbers<[2], [1], [1], [2], [0, 0, 0, 1, 1, 2], [0], [0]>} : vector<4x8x32xbf16>, vector<4x32x8xbf16>, vector<4x8x8xf32> -> vector<4x8x8xf32>
    "tpu.trace_stop"() : () -> ()
    %c0_5 = arith.constant 0 : index
    %c0_6 = arith.constant 0 : index
    %c0_7 = arith.constant 0 : index
    %7 = vector.load %arg4[%c0_5, %c0_6, %c0_7] : memref<4x1x8xf32, #tpu.memory_space<vmem>>, vector<4x1x8xf32>
    %8 = vector.broadcast %7 : vector<4x1x8xf32> to vector<4x8x8xf32>
    %9 = arith.addf %6, %8 : vector<4x8x8xf32>
    %c0_8 = arith.constant 0 : index
    %c0_9 = arith.constant 0 : index
    %c0_10 = arith.constant 0 : index
    %10 = vector.load %arg5[%c0_8, %c0_9, %c0_10] : memref<4x32x8xbf16, #tpu.memory_space<vmem>>, vector<4x32x8xbf16>
    "tpu.trace_start"() <{level = 10 : i32, message = "hsd,hde->hse"}> : () -> ()
    %cst_11 = arith.constant dense<0.000000e+00> : vector<4x8x8xf32>
    %11 = tpu.matmul %4, %10, %cst_11 {dimension_numbers = #tpu.dot_dimension_numbers<[2], [1], [1], [2], [0, 0, 0, 1, 1, 2], [0], [0]>} : vector<4x8x32xbf16>, vector<4x32x8xbf16>, vector<4x8x8xf32> -> vector<4x8x8xf32>
    "tpu.trace_stop"() : () -> ()
    %c0_12 = arith.constant 0 : index
    %c0_13 = arith.constant 0 : index
    %c0_14 = arith.constant 0 : index
    %12 = vector.load %arg6[%c0_12, %c0_13, %c0_14] : memref<4x1x8xf32, #tpu.memory_space<vmem>>, vector<4x1x8xf32>
    %13 = vector.broadcast %12 : vector<4x1x8xf32> to vector<4x8x8xf32>
    %14 = arith.addf %11, %13 : vector<4x8x8xf32>
    %15 = arith.truncf %9 : vector<4x8x8xf32> to vector<4x8x8xbf16>
    %c0_15 = arith.constant 0 : index
    %c0_16 = arith.constant 0 : index
    %c0_17 = arith.constant 0 : index
    %c0_18 = arith.constant 0 : index
    %16 = vector.load %arg7[%c0_15, %c0_16, %c0_17, %c0_18] : memref<1x4x8x8xbf16, #tpu.memory_space<vmem>>, vector<1x4x8x8xbf16>
    %17 = vector.shape_cast %16 : vector<1x4x8x8xbf16> to vector<4x8x8xbf16>
    %18 = vector.shape_cast %15 : vector<4x8x8xbf16> to vector<1x4x8x8xbf16>
    tpu.vector_store %arg7[%c0_15, %c0_16, %c0_17, %c0_18], %18 {strides = array<i32>} : memref<1x4x8x8xbf16, #tpu.memory_space<vmem>>, vector<1x4x8x8xbf16>,
    %19 = arith.truncf %14 : vector<4x8x8xf32> to vector<4x8x8xbf16>
    %c0_19 = arith.constant 0 : index
    %c0_20 = arith.constant 0 : index
    %c0_21 = arith.constant 0 : index
    %c0_22 = arith.constant 0 : index
    %20 = vector.load %arg8[%c0_19, %c0_20, %c0_21, %c0_22] : memref<1x4x8x8xbf16, #tpu.memory_space<vmem>>, vector<1x4x8x8xbf16>
    %21 = vector.shape_cast %20 : vector<1x4x8x8xbf16> to vector<4x8x8xbf16>
    %22 = vector.shape_cast %19 : vector<4x8x8xbf16> to vector<1x4x8x8xbf16>
    tpu.vector_store %arg8[%c0_19, %c0_20, %c0_21, %c0_22], %22 {strides = array<i32>} : memref<1x4x8x8xbf16, #tpu.memory_space<vmem>>, vector<1x4x8x8xbf16>,
    return
  }
  func.func @transform_0(%arg0: i32, %arg1: i32) -> (i32, i32, i32) {
    %c0_i32 = arith.constant 0 : i32
    %c0_i32_0 = arith.constant 0 : i32
    return %arg0, %arg1, %c0_i32 : i32, i32, i32
  }
  func.func @transform_1(%arg0: i32, %arg1: i32) -> (i32, i32, i32) {
    %c0_i32 = arith.constant 0 : i32
    %c0_i32_0 = arith.constant 0 : i32
    %c0_i32_1 = arith.constant 0 : i32
    %c0_i32_2 = arith.constant 0 : i32
    return %c0_i32, %c0_i32_0, %c0_i32_1 : i32, i32, i32
  }
  func.func @transform_2(%arg0: i32, %arg1: i32) -> (i32, i32, i32) {
    %c0_i32 = arith.constant 0 : i32
    %c0_i32_0 = arith.constant 0 : i32
    %c0_i32_1 = arith.constant 0 : i32
    %c0_i32_2 = arith.constant 0 : i32
    return %c0_i32, %c0_i32_0, %c0_i32_1 : i32, i32, i32
  }
  func.func @transform_3(%arg0: i32, %arg1: i32) -> (i32, i32, i32) {
    %c0_i32 = arith.constant 0 : i32
    %c0_i32_0 = arith.constant 0 : i32
    %c0_i32_1 = arith.constant 0 : i32
    %c0_i32_2 = arith.constant 0 : i32
    return %c0_i32, %c0_i32_0, %c0_i32_1 : i32, i32, i32
  }
  func.func @transform_4(%arg0: i32, %arg1: i32) -> (i32, i32, i32) {
    %c0_i32 = arith.constant 0 : i32
    %c0_i32_0 = arith.constant 0 : i32
    %c0_i32_1 = arith.constant 0 : i32
    %c0_i32_2 = arith.constant 0 : i32
    return %c0_i32, %c0_i32_0, %c0_i32_1 : i32, i32, i32
  }
  func.func @transform_5(%arg0: i32, %arg1: i32) -> (i32, i32, i32, i32) {
    %c0_i32 = arith.constant 0 : i32
    %c0_i32_0 = arith.constant 0 : i32
    %c0_i32_1 = arith.constant 0 : i32
    return %arg0, %c0_i32, %arg1, %c0_i32_0 : i32, i32, i32, i32
  }
  func.func @transform_6(%arg0: i32, %arg1: i32) -> (i32, i32, i32, i32) {
    %c0_i32 = arith.constant 0 : i32
    %c0_i32_0 = arith.constant 0 : i32
    %c0_i32_1 = arith.constant 0 : i32
    return %arg0, %c0_i32, %arg1, %c0_i32_0 : i32, i32, i32, i32
  }
}

</mosaic_0001>

<llo_original>
// kernel: tpu_custom_call.1
$region0: #{tpu_custom_call.1}
  #allocation0 [shape = 'u32[]', space=smem, size = 0x4, offset = 0x4, fixed_abs, tag = 'smem constant byte address 0x4 - core index']
  #allocation1 [shape = 'u32[72,128]{1,0:T(1,128)}', space=vmem, size = 0x9000, scoped, tag = 'internal scratch']
  %s0 = inlined_call_operand.vmem [shape: bf16[2,8,32], index: 0, kind: input, shape index: {}]
  %s1 = inlined_call_operand.vmem [shape: bf16[4,32,8], index: 1, kind: input, shape index: {}]
  %s2 = inlined_call_operand.vmem [shape: f32[4,1,8], index: 2, kind: input, shape index: {}]
  %s3 = inlined_call_operand.vmem [shape: bf16[4,32,8], index: 3, kind: input, shape index: {}]
  %s4 = inlined_call_operand.vmem [shape: f32[4,1,8], index: 4, kind: input, shape index: {}]
  %s5 = inlined_call_operand.hbm [shape: bf16[2,4,8,8], index: 5, kind: output, shape index: {0}]
  %s6 = inlined_call_operand.hbm [shape: bf16[2,4,8,8], index: 6, kind: output, shape index: {1}]
  %7 = xla_tuple %s5, %s6
  %s8 = sld [smem:[#allocation0]]
  $region61: #{tpu_custom_call.1} parent=0
    _
  %s10 = ssub.s32 1, %s8
  %s11 = scalar_select 0, %s10, %s8
  $region1: #{tpu_custom_call.1} parent=0
    #allocation2 [shape = 'u8[16384]{0}', space=vmem, size = 0x4000, scoped, tag = 'output window, operand 0']
    #allocation3 [shape = 's32[2]{0}', space=sflag, size = 0x8, scoped, tag = 'scoped memory for tpu_custom_call.1']
    #allocation4 [shape = 'u8[16384]{0}', space=vmem, size = 0x4000, scoped, tag = 'output window, operand 1']
    #allocation5 [shape = 's32[2]{0}', space=sflag, size = 0x8, scoped, tag = 'scoped memory for tpu_custom_call.1']
    %12 = vsyncpa [#allocation3], 0
    %s13 = scalar_lea.sflag [#allocation3], 1
    %14 = vsyncpa %s13, 0
    %15 = vsyncpa [#allocation5], 0
    %s16 = scalar_lea.sflag [#allocation5], 1
    %17 = vsyncpa %s16, 0
    loop: start=0, step=1, limit=4
    $region2: #{tpu_custom_call.1} parent=1 // loop_pre_header
      _
    $region3: #{tpu_custom_call.1} parent=1 // loop_header
      %s19 = sphi 0, %s23
      %p20 = scmp.ge.s32.totalorder %s19, 4
      %s26 = sphi 0, %s38
      %s27 = sphi 0, %s34
      %s28 = sphi 0, %s26
      %s29 = sphi 0, %s27
      %s30 = sphi 0, %s28
      %s31 = sphi 0, %s29
      %s43 = sphi 0, %s45
      %s46 = sphi 0, %s43
      %s47 = sphi 0, %s46
      %s63 = sphi 0, %s47
      %s67 = sphi 0, %s67
      %s69 = sphi 0, %s67
      %s70 = sphi 0, %s69
      %s84 = sphi 0, %s70
      %s88 = sphi 0, %s88
      %s90 = sphi 0, %s88
      %s91 = sphi 0, %s90
      %s105 = sphi 0, %s91
      %s109 = sphi 0, %s109
      %s111 = sphi 0, %s109
      %s112 = sphi 0, %s111
      %s126 = sphi 0, %s112
      %s130 = sphi 0, %s130
      %s132 = sphi 0, %s130
      %s133 = sphi 0, %s132
      %s147 = sphi 0, %s133
      %s155 = sphi 0, %s157
      %s158 = sphi 0, %s155
      %s159 = sphi 0, %s158
      %s175 = sphi 0, %s159
      %s183 = sphi 0, %s185
      %s186 = sphi 0, %s183
      %s187 = sphi 0, %s186
      %s203 = sphi 0, %s187
    $region4: #{tpu_custom_call.1} parent=1 // loop_header_branch
      %22 = sbr.rel (%p20) target = $region8
    $region5: #{tpu_custom_call.1} parent=1 // loop_body
      %s24 = ssub.s32 %s19, 1
      %s25 = ssub.s32 %s19, 2
      %s32 = sadd.s32 1, %s27
      %p33 = scmp.ge.s32.totalorder %s32, 1
      %s34 = scalar_select %p33, 0, %s32
      %s35 = sadd.s32 1, %s26
      %s36 = scalar_select %p33, %s35, %s26
      %p37 = scmp.ge.s32.totalorder %s36, 2
      %s38 = scalar_select %p37, 0, %s36
      %s39 = ssub.s32 %s26, %s38
      %s40 = ssub.s32 %s27, %s34
      %s41 = sor.u32 %s39, %s40
      %p42 = scmp.eq.s32.totalorder %s41, 0
      %s44 = sadd.s32 %s43, 1
      %s45 = scalar_select %p42, %s43, %s44
      %p48 = pneg %p42
      %p49 = scmp.eq.s32.totalorder %s19, 1
      %p50 = por %p48, %p49
      %p51 = scmp.ne.s32.totalorder %s43, %s46
      %p52 = scmp.eq.s32.totalorder %s19, 0
      %p53 = por %p51, %p52
      %p54 = scmp.ne.s32.totalorder %s43, %s46
      %p55 = scmp.eq.s32.totalorder %s24, 1
      %p56 = por %p54, %p55
      %p57 = scmp.ne.s32.totalorder %s46, %s47
      %p58 = scmp.eq.s32.totalorder %s24, 0
      %p59 = por %p57, %p58
      %p60 = scmp.ne.s32.totalorder %s46, %s47
      %p61 = scmp.eq.s32.totalorder %s25, 1
      %p62 = por %p60, %p61
      %p64 = scmp.ne.s32.totalorder %s47, %s63
      %p65 = scmp.eq.s32.totalorder %s25, 0
      %p66 = por %p64, %p65
      %s68 = sadd.s32 %s67, 1
      %p71 = scmp.eq.s32.totalorder %s19, 1
      %p72 = scmp.ne.s32.totalorder %s67, %s69
      %p73 = scmp.eq.s32.totalorder %s19, 0
      %p74 = por %p72, %p73
      %p75 = scmp.ne.s32.totalorder %s67, %s69
      %p76 = scmp.eq.s32.totalorder %s24, 1
      %p77 = por %p75, %p76
      %p78 = scmp.ne.s32.totalorder %s69, %s70
      %p79 = scmp.eq.s32.totalorder %s24, 0
      %p80 = por %p78, %p79
      %p81 = scmp.ne.s32.totalorder %s69, %s70
      %p82 = scmp.eq.s32.totalorder %s25, 1
      %p83 = por %p81, %p82
      %p85 = scmp.ne.s32.totalorder %s70, %s84
      %p86 = scmp.eq.s32.totalorder %s25, 0
      %p87 = por %p85, %p86
      %s89 = sadd.s32 %s88, 1
      %p92 = scmp.eq.s32.totalorder %s19, 1
      %p93 = scmp.ne.s32.totalorder %s88, %s90
      %p94 = scmp.eq.s32.totalorder %s19, 0
      %p95 = por %p93, %p94
      %p96 = scmp.ne.s32.totalorder %s88, %s90
      %p97 = scmp.eq.s32.totalorder %s24, 1
      %p98 = por %p96, %p97
      %p99 = scmp.ne.s32.totalorder %s90, %s91
      %p100 = scmp.eq.s32.totalorder %s24, 0
      %p101 = por %p99, %p100
      %p102 = scmp.ne.s32.totalorder %s90, %s91
      %p103 = scmp.eq.s32.totalorder %s25, 1
      %p104 = por %p102, %p103
      %p106 = scmp.ne.s32.totalorder %s91, %s105
      %p107 = scmp.eq.s32.totalorder %s25, 0
      %p108 = por %p106, %p107
      %s110 = sadd.s32 %s109, 1
      %p113 = scmp.eq.s32.totalorder %s19, 1
      %p114 = scmp.ne.s32.totalorder %s109, %s111
      %p115 = scmp.eq.s32.totalorder %s19, 0
      %p116 = por %p114, %p115
      %p117 = scmp.ne.s32.totalorder %s109, %s111
      %p118 = scmp.eq.s32.totalorder %s24, 1
      %p119 = por %p117, %p118
      %p120 = scmp.ne.s32.totalorder %s111, %s112
      %p121 = scmp.eq.s32.totalorder %s24, 0
      %p122 = por %p120, %p121
      %p123 = scmp.ne.s32.totalorder %s111, %s112
      %p124 = scmp.eq.s32.totalorder %s25, 1
      %p125 = por %p123, %p124
      %p127 = scmp.ne.s32.totalorder %s112, %s126
      %p128 = scmp.eq.s32.totalorder %s25, 0
      %p129 = por %p127, %p128
      %s131 = sadd.s32 %s130, 1
      %p134 = scmp.eq.s32.totalorder %s19, 1
      %p135 = scmp.ne.s32.totalorder %s130, %s132
      %p136 = scmp.eq.s32.totalorder %s19, 0
      %p137 = por %p135, %p136
      %p138 = scmp.ne.s32.totalorder %s130, %s132
      %p139 = scmp.eq.s32.totalorder %s24, 1
      %p140 = por %p138, %p139
      %p141 = scmp.ne.s32.totalorder %s132, %s133
      %p142 = scmp.eq.s32.totalorder %s24, 0
      %p143 = por %p141, %p142
      %p144 = scmp.ne.s32.totalorder %s132, %s133
      %p145 = scmp.eq.s32.totalorder %s25, 1
      %p146 = por %p144, %p145
      %p148 = scmp.ne.s32.totalorder %s133, %s147
      %p149 = scmp.eq.s32.totalorder %s25, 0
      %p150 = por %p148, %p149
      %s151 = ssub.s32 %s26, %s38
      %s152 = ssub.s32 %s27, %s34
      %s153 = sor.u32 %s151, %s152
      %p154 = scmp.eq.s32.totalorder %s153, 0
      %s156 = sadd.s32 %s155, 1
      %s157 = scalar_select %p154, %s155, %s156
      %p160 = pneg %p154
      %p161 = scmp.eq.s32.totalorder %s19, 1
      %p162 = por %p160, %p161
      %p163 = scmp.ne.s32.totalorder %s155, %s158
      %p164 = scmp.eq.s32.totalorder %s19, 0
      %p165 = por %p163, %p164
      %p166 = scmp.ne.s32.totalorder %s155, %s158
      %p167 = scmp.eq.s32.totalorder %s24, 1
      %p168 = por %p166, %p167
      %p169 = scmp.ne.s32.totalorder %s158, %s159
      %p170 = scmp.eq.s32.totalorder %s24, 0
      %p171 = por %p169, %p170
      %p172 = scmp.ne.s32.totalorder %s158, %s159
      %p173 = scmp.eq.s32.totalorder %s25, 1
      %p174 = por %p172, %p173
      %p176 = scmp.ne.s32.totalorder %s159, %s175
      %p177 = scmp.eq.s32.totalorder %s25, 0
      %p178 = por %p176, %p177
      %s179 = ssub.s32 %s26, %s38
      %s180 = ssub.s32 %s27, %s34
      %s181 = sor.u32 %s179, %s180
      %p182 = scmp.eq.s32.totalorder %s181, 0
      %s184 = sadd.s32 %s183, 1
      %s185 = scalar_select %p182, %s183, %s184
      %p188 = pneg %p182
      %p189 = scmp.eq.s32.totalorder %s19, 1
      %p190 = por %p188, %p189
      %p191 = scmp.ne.s32.totalorder %s183, %s186
      %p192 = scmp.eq.s32.totalorder %s19, 0
      %p193 = por %p191, %p192
      %p194 = scmp.ne.s32.totalorder %s183, %s186
      %p195 = scmp.eq.s32.totalorder %s24, 1
      %p196 = por %p194, %p195
      %p197 = scmp.ne.s32.totalorder %s186, %s187
      %p198 = scmp.eq.s32.totalorder %s24, 0
      %p199 = por %p197, %p198
      %p200 = scmp.ne.s32.totalorder %s186, %s187
      %p201 = scmp.eq.s32.totalorder %s25, 1
      %p202 = por %p200, %p201
      %p204 = scmp.ne.s32.totalorder %s187, %s203
      %p205 = scmp.eq.s32.totalorder %s25, 0
      %p206 = por %p204, %p205
      %p207 = scmp.le.s32.totalorder 1, %s19
      %p208 = scmp.lt.s32.totalorder %s19, 3
      %p209 = pnand %p207, %p208
      %p210 = pneg %p209
      // Predicated region
      $region9: #{tpu_custom_call.1} parent=5 // pred_check
        _
      $region10: #{tpu_custom_call.1} parent=5 // pred_check_branch
        %212 = sbr.rel (%p209) target = $region12
      $region11: #{tpu_custom_call.1} parent=5 // pred_region
        %s213 = ssub.s32 %s19, 1
        // Predicated region
        $region13: #{tpu_custom_call.1} parent=11 // pred_check
          %p214 = pneg %p80
        $region14: #{tpu_custom_call.1} parent=11 // pred_check_branch
          %216 = sbr.rel (%p214) target = $region16
        $region15: #{tpu_custom_call.1} parent=11 // pred_region
          _
        $region16: #{tpu_custom_call.1} parent=11 // pred_fallthru
          _
        // Predicated region
        $region17: #{tpu_custom_call.1} parent=11 // pred_check
          %p217 = pneg %p101
        $region18: #{tpu_custom_call.1} parent=11 // pred_check_branch
          %219 = sbr.rel (%p217) target = $region20
        $region19: #{tpu_custom_call.1} parent=11 // pred_region
          _
        $region20: #{tpu_custom_call.1} parent=11 // pred_fallthru
          _
        // Predicated region
        $region21: #{tpu_custom_call.1} parent=11 // pred_check
          %p220 = pneg %p122
        $region22: #{tpu_custom_call.1} parent=11 // pred_check_branch
          %222 = sbr.rel (%p220) target = $region24
        $region23: #{tpu_custom_call.1} parent=11 // pred_region
          _
        $region24: #{tpu_custom_call.1} parent=11 // pred_fallthru
          _
        // Predicated region
        $region25: #{tpu_custom_call.1} parent=11 // pred_check
          %p223 = pneg %p143
        $region26: #{tpu_custom_call.1} parent=11 // pred_check_branch
          %225 = sbr.rel (%p223) target = $region28
        $region27: #{tpu_custom_call.1} parent=11 // pred_region
          _
        $region28: #{tpu_custom_call.1} parent=11 // pred_fallthru
          _
      $region12: #{tpu_custom_call.1} parent=5 // pred_fallthru
        _
      %p226 = scmp.lt.s32.totalorder %s19, 2
      // Predicated region
      $region29: #{tpu_custom_call.1} parent=5 // pred_check
        %p227 = pneg %p226
      $region30: #{tpu_custom_call.1} parent=5 // pred_check_branch
        %229 = sbr.rel (%p227) target = $region32
      $region31: #{tpu_custom_call.1} parent=5 // pred_region
        // Predicated region
        $region33: #{tpu_custom_call.1} parent=31 // pred_check
          %p230 = pneg %p53
        $region34: #{tpu_custom_call.1} parent=31 // pred_check_branch
          %232 = sbr.rel (%p230) target = $region36
        $region35: #{tpu_custom_call.1} parent=31 // pred_region
          %p233 = scmp.lt.s32.totalorder %s26, 1
          %s234 = scalar_select %p233, %s26, 1
          %p235 = scmp.lt.s32.totalorder %s27, 0
          %s236 = scalar_select %p235, %s27, 0
          %s237 = sadd.s32 %s236, %s234
          %s238 = smul.addr %s237, 4
          %s239 = scalar_lea.vmem %s0, %s238
        $region36: #{tpu_custom_call.1} parent=31 // pred_fallthru
          _
      $region32: #{tpu_custom_call.1} parent=5 // pred_fallthru
        _
      %p240 = scmp.le.s32.totalorder 1, %s19
      %p241 = scmp.lt.s32.totalorder %s19, 3
      %p242 = pnand %p240, %p241
      %p243 = pneg %p242
      // Predicated region
      $region37: #{tpu_custom_call.1} parent=5 // pred_check
        _
      $region38: #{tpu_custom_call.1} parent=5 // pred_check_branch
        %245 = sbr.rel (%p242) target = $region40
      $region39: #{tpu_custom_call.1} parent=5 // pred_region
        %s246 = ssub.s32 %s19, 1
        %p247 = scmp.lt.s32.totalorder %s28, 1
        %s248 = scalar_select %p247, %s28, 1
        %p249 = scmp.lt.s32.totalorder %s29, 0
        %s250 = scalar_select %p249, %s29, 0
        %s251 = sadd.s32 %s250, %s248
        %s252 = smul.addr %s251, 4
        %s253 = scalar_lea.vmem %s0, %s252
        %p254 = pneg %p59
        %p255 = pneg %p56
        %p256 = pneg %p80
        %p257 = pneg %p77
        %p258 = pneg %p101
        %p259 = pneg %p98
        %p260 = pneg %p122
        %p261 = pneg %p119
        %p262 = pneg %p143
        %p263 = pneg %p140
        %p264 = pneg %p171
        %p265 = pneg %p168
        %s266 = sand.u32 %s158, 1
        %s267 = scalar_lea.sflag [#allocation3], %s266
        %s268 = sand.u32 %s158, 1
        %s269 = smul.addr %s268, 16
        %s270 = scalar_lea.vmem [#allocation2], %s269
        %p271 = pneg %p199
        %p272 = pneg %p196
        %s273 = sand.u32 %s186, 1
        %s274 = scalar_lea.sflag [#allocation5], %s273
        %s275 = sand.u32 %s186, 1
        %s276 = smul.addr %s275, 16
        %s277 = scalar_lea.vmem [#allocation4], %s276
        %p278 = scmp.lt.s32.totalorder %s28, 1
        %s279 = scalar_select %p278, %s28, 1
        %p280 = scmp.lt.s32.totalorder %s29, 0
        %s281 = scalar_select %p280, %s29, 0
        %s282 = sadd.s32 %s281, %s279
        %s283 = smul.addr %s282, 4
        %s284 = scalar_lea.vmem %s0, %s283
        %v286 = vld [vmem:[%s284] sm:$0xf]
        %v287 = vld [vmem:[%s1] sm:$0xf]
        %v288 = vld [vmem:[%s1 + $0x4] sm:$0xf]
        %v289 = vld [vmem:[%s1 + $0x8] sm:$0xf]
        %v290 = vld [vmem:[%s1 + $0xc] sm:$0xf]
        %v291 = vld [vmem:[%s1 + $0x10] sm:$0xf]
        %v292 = vld [vmem:[%s1 + $0x14] sm:$0xf]
        %v293 = vld [vmem:[%s1 + $0x18] sm:$0xf]
        %v294 = vld [vmem:[%s1 + $0x1c] sm:$0xf]
        %v295 = vld [vmem:[%s1 + $0x20] sm:$0xf]
        %v296 = vld [vmem:[%s1 + $0x24] sm:$0xf]
        %v297 = vld [vmem:[%s1 + $0x28] sm:$0xf]
        %v298 = vld [vmem:[%s1 + $0x2c] sm:$0xf]
        %v299 = vld [vmem:[%s1 + $0x30] sm:$0xf]
        %v300 = vld [vmem:[%s1 + $0x34] sm:$0xf]
        %v301 = vld [vmem:[%s1 + $0x38] sm:$0xf]
        %v302 = vld [vmem:[%s1 + $0x3c] sm:$0xf]
        %v303 = vld [vmem:[%s2] sm:$0x1]
        %v304 = vld [vmem:[%s2 + $0x1] sm:$0x1]
        %v305 = vld [vmem:[%s2 + $0x2] sm:$0x1]
        %v306 = vld [vmem:[%s2 + $0x3] sm:$0x1]
        %v311 = vperm.slane %v303, 0
        %v312 = vperm.slane %v304, 0
        %v313 = vperm.slane %v305, 0
        %v314 = vperm.slane %v306, 0
        %v323 = vunpack.c.l.b16 %v287
        %v324 = vunpack.c.l.b16 %v288
        %v325 = vunpack.c.l.b16 %v289
        %v326 = vunpack.c.l.b16 %v290
        %v327 = vpack.c.b16 %v324, %v323
        %v328 = vpack.c.b16 %v326, %v325
        %vm331 = vcmask 261120
        %v333 = vsel %vm331, %v286, 0
        %335 = vmatpush.bf16.msra.mxu0 0
        %336 = vmatpush.bf16.msra.mxu0 0
        %337 = vmatpush.bf16.msra.mxu0 0
        %338 = vmatpush.bf16.msra.mxu0 0
        %339 = vmatpush.bf16.msra.mxu0 0
        %340 = vmatpush.bf16.msra.mxu0 0
        %341 = vmatpush.bf16.msra.mxu0 %v328
        %342 = vmatpush.bf16.msra.mxu0 %v327
        %343 = vmatmul.bf16.gmra.mxu0 %v333
        %v344 = vpop.f32.mrf.mxu0
        %v345 = vadd.f32 %v311, %v344
        %v346 = vpop.f32.mrf.mxu0
        %347 = vdwg.mxu0
        %v352 = vunpack.c.l.b16 %v291
        %v353 = vunpack.c.l.b16 %v292
        %v354 = vunpack.c.l.b16 %v293
        %v355 = vunpack.c.l.b16 %v294
        %v356 = vpack.c.b16 %v353, %v352
        %v357 = vpack.c.b16 %v355, %v354
        %360 = vmatpush.bf16.msra.mxu0 0
        %361 = vmatpush.bf16.msra.mxu0 0
        %362 = vmatpush.bf16.msra.mxu0 0
        %363 = vmatpush.bf16.msra.mxu0 0
        %364 = vmatpush.bf16.msra.mxu0 0
        %365 = vmatpush.bf16.msra.mxu0 0
        %366 = vmatpush.bf16.msra.mxu0 %v357
        %367 = vmatpush.bf16.msra.mxu0 %v356
        %368 = vmatmul.bf16.gmra.mxu0 %v333
        %v369 = vpop.f32.mrf.mxu0
        %v370 = vadd.f32 %v312, %v369
        %v371 = vpop.f32.mrf.mxu0
        %372 = vdwg.mxu0
        %v377 = vunpack.c.l.b16 %v295
        %v378 = vunpack.c.l.b16 %v296
        %v379 = vunpack.c.l.b16 %v297
        %v380 = vunpack.c.l.b16 %v298
        %v381 = vpack.c.b16 %v378, %v377
        %v382 = vpack.c.b16 %v380, %v379
        %385 = vmatpush.bf16.msra.mxu0 0
        %386 = vmatpush.bf16.msra.mxu0 0
        %387 = vmatpush.bf16.msra.mxu0 0
        %388 = vmatpush.bf16.msra.mxu0 0
        %389 = vmatpush.bf16.msra.mxu0 0
        %390 = vmatpush.bf16.msra.mxu0 0
        %391 = vmatpush.bf16.msra.mxu0 %v382
        %392 = vmatpush.bf16.msra.mxu0 %v381
        %393 = vmatmul.bf16.gmra.mxu0 %v333
        %v394 = vpop.f32.mrf.mxu0
        %v395 = vadd.f32 %v313, %v394
        %v396 = vpop.f32.mrf.mxu0
        %397 = vdwg.mxu0
        %v402 = vunpack.c.l.b16 %v299
        %v403 = vunpack.c.l.b16 %v300
        %v404 = vunpack.c.l.b16 %v301
        %v405 = vunpack.c.l.b16 %v302
        %v406 = vpack.c.b16 %v403, %v402
        %v407 = vpack.c.b16 %v405, %v404
        %410 = vmatpush.bf16.msra.mxu0 0
        %411 = vmatpush.bf16.msra.mxu0 0
        %412 = vmatpush.bf16.msra.mxu0 0
        %413 = vmatpush.bf16.msra.mxu0 0
        %414 = vmatpush.bf16.msra.mxu0 0
        %415 = vmatpush.bf16.msra.mxu0 0
        %416 = vmatpush.bf16.msra.mxu0 %v407
        %417 = vmatpush.bf16.msra.mxu0 %v406
        %418 = vmatmul.bf16.gmra.mxu0 %v333
        %v419 = vpop.f32.mrf.mxu0
        %v420 = vadd.f32 %v314, %v419
        %v421 = vpop.f32.mrf.mxu0
        %422 = vdwg.mxu0
        %v423 = vld [vmem:[%s3] sm:$0xf]
        %v424 = vld [vmem:[%s3 + $0x4] sm:$0xf]
        %v425 = vld [vmem:[%s3 + $0x8] sm:$0xf]
        %v426 = vld [vmem:[%s3 + $0xc] sm:$0xf]
        %v427 = vld [vmem:[%s3 + $0x10] sm:$0xf]
        %v428 = vld [vmem:[%s3 + $0x14] sm:$0xf]
        %v429 = vld [vmem:[%s3 + $0x18] sm:$0xf]
        %v430 = vld [vmem:[%s3 + $0x1c] sm:$0xf]
        %v431 = vld [vmem:[%s3 + $0x20] sm:$0xf]
        %v432 = vld [vmem:[%s3 + $0x24] sm:$0xf]
        %v433 = vld [vmem:[%s3 + $0x28] sm:$0xf]
        %v434 = vld [vmem:[%s3 + $0x2c] sm:$0xf]
        %v435 = vld [vmem:[%s3 + $0x30] sm:$0xf]
        %v436 = vld [vmem:[%s3 + $0x34] sm:$0xf]
        %v437 = vld [vmem:[%s3 + $0x38] sm:$0xf]
        %v438 = vld [vmem:[%s3 + $0x3c] sm:$0xf]
        %v439 = vld [vmem:[%s4] sm:$0x1]
        %v440 = vld [vmem:[%s4 + $0x1] sm:$0x1]
        %v441 = vld [vmem:[%s4 + $0x2] sm:$0x1]
        %v442 = vld [vmem:[%s4 + $0x3] sm:$0x1]
        %v447 = vperm.slane %v439, 0
        %v448 = vperm.slane %v440, 0
        %v449 = vperm.slane %v441, 0
        %v450 = vperm.slane %v442, 0
        %v459 = vunpack.c.l.b16 %v423
        %v460 = vunpack.c.l.b16 %v424
        %v461 = vunpack.c.l.b16 %v425
        %v462 = vunpack.c.l.b16 %v426
        %v463 = vpack.c.b16 %v460, %v459
        %v464 = vpack.c.b16 %v462, %v461
        %467 = vmatpush.bf16.msra.mxu0 0
        %468 = vmatpush.bf16.msra.mxu0 0
        %469 = vmatpush.bf16.msra.mxu0 0
        %470 = vmatpush.bf16.msra.mxu0 0
        %471 = vmatpush.bf16.msra.mxu0 0
        %472 = vmatpush.bf16.msra.mxu0 0
        %473 = vmatpush.bf16.msra.mxu0 %v464
        %474 = vmatpush.bf16.msra.mxu0 %v463
        %475 = vmatmul.bf16.gmra.mxu0 %v333
        %v476 = vpop.f32.mrf.mxu0
        %v477 = vadd.f32 %v447, %v476
        %v478 = vpop.f32.mrf.mxu0
        %479 = vdwg.mxu0
        %v484 = vunpack.c.l.b16 %v427
        %v485 = vunpack.c.l.b16 %v428
        %v486 = vunpack.c.l.b16 %v429
        %v487 = vunpack.c.l.b16 %v430
        %v488 = vpack.c.b16 %v485, %v484
        %v489 = vpack.c.b16 %v487, %v486
        %492 = vmatpush.bf16.msra.mxu0 0
        %493 = vmatpush.bf16.msra.mxu0 0
        %494 = vmatpush.bf16.msra.mxu0 0
        %495 = vmatpush.bf16.msra.mxu0 0
        %496 = vmatpush.bf16.msra.mxu0 0
        %497 = vmatpush.bf16.msra.mxu0 0
        %498 = vmatpush.bf16.msra.mxu0 %v489
        %499 = vmatpush.bf16.msra.mxu0 %v488
        %500 = vmatmul.bf16.gmra.mxu0 %v333
        %v501 = vpop.f32.mrf.mxu0
        %v502 = vadd.f32 %v448, %v501
        %v503 = vpop.f32.mrf.mxu0
        %504 = vdwg.mxu0
        %v509 = vunpack.c.l.b16 %v431
        %v510 = vunpack.c.l.b16 %v432
        %v511 = vunpack.c.l.b16 %v433
        %v512 = vunpack.c.l.b16 %v434
        %v513 = vpack.c.b16 %v510, %v509
        %v514 = vpack.c.b16 %v512, %v511
        %517 = vmatpush.bf16.msra.mxu0 0
        %518 = vmatpush.bf16.msra.mxu0 0
        %519 = vmatpush.bf16.msra.mxu0 0
        %520 = vmatpush.bf16.msra.mxu0 0
        %521 = vmatpush.bf16.msra.mxu0 0
        %522 = vmatpush.bf16.msra.mxu0 0
        %523 = vmatpush.bf16.msra.mxu0 %v514
        %524 = vmatpush.bf16.msra.mxu0 %v513
        %525 = vmatmul.bf16.gmra.mxu0 %v333
        %v526 = vpop.f32.mrf.mxu0
        %v527 = vadd.f32 %v449, %v526
        %v528 = vpop.f32.mrf.mxu0
        %529 = vdwg.mxu0
        %v534 = vunpack.c.l.b16 %v435
        %v535 = vunpack.c.l.b16 %v436
        %v536 = vunpack.c.l.b16 %v437
        %v537 = vunpack.c.l.b16 %v438
        %v538 = vpack.c.b16 %v535, %v534
        %v539 = vpack.c.b16 %v537, %v536
        %542 = vmatpush.bf16.msra.mxu0 0
        %543 = vmatpush.bf16.msra.mxu0 0
        %544 = vmatpush.bf16.msra.mxu0 0
        %545 = vmatpush.bf16.msra.mxu0 0
        %546 = vmatpush.bf16.msra.mxu0 0
        %547 = vmatpush.bf16.msra.mxu0 0
        %548 = vmatpush.bf16.msra.mxu0 %v539
        %549 = vmatpush.bf16.msra.mxu0 %v538
        %550 = vmatmul.bf16.gmra.mxu0 %v333
        %v551 = vpop.f32.mrf.mxu0
        %v552 = vadd.f32 %v450, %v551
        %v553 = vpop.f32.mrf.mxu0
        %554 = vdwg.mxu0
        %v555 = vpack.c.bf16 %v345, %v345
        %v556 = vpack.c.bf16 %v370, %v370
        %v557 = vpack.c.bf16 %v395, %v395
        %v558 = vpack.c.bf16 %v420, %v420
        %vm559 = vcmask 60416
        %560 = vst.msk [vmem:[%s270] sm:$0xf] %vm559, %v555
        %561 = vst.msk [vmem:[%s270 + $0x4] sm:$0xf] %vm559, %v556
        %562 = vst.msk [vmem:[%s270 + $0x8] sm:$0xf] %vm559, %v557
        %563 = vst.msk [vmem:[%s270 + $0xc] sm:$0xf] %vm559, %v558
        %v564 = vpack.c.bf16 %v477, %v477
        %v565 = vpack.c.bf16 %v502, %v502
        %v566 = vpack.c.bf16 %v527, %v527
        %v567 = vpack.c.bf16 %v552, %v552
        %568 = vst.msk [vmem:[%s277] sm:$0xf] %vm559, %v564
        %569 = vst.msk [vmem:[%s277 + $0x4] sm:$0xf] %vm559, %v565
        %570 = vst.msk [vmem:[%s277 + $0x8] sm:$0xf] %vm559, %v566
        %571 = vst.msk [vmem:[%s277 + $0xc] sm:$0xf] %vm559, %v567
        %s572 = sand.u32 %s158, 1
        %s573 = scalar_lea.sflag [#allocation3], %s572
        %s574 = sand.u32 %s158, 1
        %s575 = smul.addr %s574, 16
        %s576 = scalar_lea.vmem [#allocation2], %s575
        %s577 = sand.u32 %s186, 1
        %s578 = scalar_lea.sflag [#allocation5], %s577
        %s579 = sand.u32 %s186, 1
        %s580 = smul.addr %s579, 16
        %s581 = scalar_lea.vmem [#allocation4], %s580
        // Predicated region
        $region41: #{tpu_custom_call.1} parent=39 // pred_check
          %p582 = pneg %p168
        $region42: #{tpu_custom_call.1} parent=39 // pred_check_branch
          %584 = sbr.rel (%p582) target = $region44
        $region43: #{tpu_custom_call.1} parent=39 // pred_region
          %586 = vsyncadd %s573, 0
          %s587 = smul.addr %s28, 4
          %s588 = sadd.s32 %s29, %s587
          %s589 = smul.addr %s588, 4
          %s590 = scalar_lea.hbm %s5, %s589
          %s591 = sshll.u32 %s576, 4
          %s592 = int_to_ptr.vmem [resolvable:$true] %s591
          %s593 = sshll.u32 %s590, 4
          %s594 = int_to_ptr.hbm [resolvable:$true] %s593
          %599 = dma.vmem_to_hbm [thread:$0]  %s592, 256, %s594, %s573, 64, 64, 4
        $region44: #{tpu_custom_call.1} parent=39 // pred_fallthru
          _
        // Predicated region
        $region45: #{tpu_custom_call.1} parent=39 // pred_check
          %p600 = pneg %p196
        $region46: #{tpu_custom_call.1} parent=39 // pred_check_branch
          %602 = sbr.rel (%p600) target = $region48
        $region47: #{tpu_custom_call.1} parent=39 // pred_region
          %604 = vsyncadd %s578, 0
          %s605 = smul.addr %s28, 4
          %s606 = sadd.s32 %s29, %s605
          %s607 = smul.addr %s606, 4
          %s608 = scalar_lea.hbm %s6, %s607
          %s609 = sshll.u32 %s581, 4
          %s610 = int_to_ptr.vmem [resolvable:$true] %s609
          %s611 = sshll.u32 %s608, 4
          %s612 = int_to_ptr.hbm [resolvable:$true] %s611
          %617 = dma.vmem_to_hbm [thread:$0]  %s610, 256, %s612, %s578, 64, 64, 4
        $region48: #{tpu_custom_call.1} parent=39 // pred_fallthru
          _
      $region40: #{tpu_custom_call.1} parent=5 // pred_fallthru
        _
      %p618 = scmp.le.s32.totalorder 2, %s19
      // Predicated region
      $region49: #{tpu_custom_call.1} parent=5 // pred_check
        %p619 = pneg %p618
      $region50: #{tpu_custom_call.1} parent=5 // pred_check_branch
        %621 = sbr.rel (%p619) target = $region52
      $region51: #{tpu_custom_call.1} parent=5 // pred_region
        %s622 = ssub.s32 %s19, 2
        // Predicated region
        $region53: #{tpu_custom_call.1} parent=51 // pred_check
          %p623 = pneg %p174
        $region54: #{tpu_custom_call.1} parent=51 // pred_check_branch
          %625 = sbr.rel (%p623) target = $region56
        $region55: #{tpu_custom_call.1} parent=51 // pred_region
          %s626 = sand.u32 %s159, 1
          %s627 = scalar_lea.sflag [#allocation3], %s626
          %s628 = sand.u32 %s159, 1
          %s629 = smul.addr %s628, 16
          %s630 = scalar_lea.vmem [#allocation2], %s629
          %632 = dma.done %s627, 256
        $region56: #{tpu_custom_call.1} parent=51 // pred_fallthru
          _
        // Predicated region
        $region57: #{tpu_custom_call.1} parent=51 // pred_check
          %p633 = pneg %p202
        $region58: #{tpu_custom_call.1} parent=51 // pred_check_branch
          %635 = sbr.rel (%p633) target = $region60
        $region59: #{tpu_custom_call.1} parent=51 // pred_region
          %s636 = sand.u32 %s187, 1
          %s637 = scalar_lea.sflag [#allocation5], %s636
          %s638 = sand.u32 %s187, 1
          %s639 = smul.addr %s638, 16
          %s640 = scalar_lea.vmem [#allocation4], %s639
          %642 = dma.done %s637, 256
        $region60: #{tpu_custom_call.1} parent=51 // pred_fallthru
          _
      $region52: #{tpu_custom_call.1} parent=5 // pred_fallthru
        _
    $region6: #{tpu_custom_call.1} parent=1 // loop_footer
      %s23 = sadd.s32 1, %s19
    $region7: #{tpu_custom_call.1} parent=1 // loop_footer_branch
      %18 = sbr.rel target = $region3
    $region8: #{tpu_custom_call.1} parent=1 // loop_exit
      _
    %643 = vsyncpa [#allocation3], 1
    %s644 = scalar_lea.sflag [#allocation3], 1
    %645 = vsyncpa %s644, 1
    %646 = vsyncpa [#allocation5], 1
    %s647 = scalar_lea.sflag [#allocation5], 1
    %648 = vsyncpa %s647, 1

</llo_original>
